<compile_context>
chip_gen: v6e
topology: v6e:2x2x1
jax: 0.10.0
libtpu: 0.0.40
codegen_flags: <defaults>
</compile_context>

<pallas_src>
import jax
import jax.numpy as jnp
from jax import lax
from jax.experimental import pallas as pl
from jax.experimental.pallas import tpu as pltpu

_MIB = 1024 * 1024


def _phi(x):
    # elu(x) + 1  ==  where(x > 0, x + 1, exp(x)); exp runs in the EUP slot.
    return jnp.where(x > 0, x + 1.0, jnp.exp(x))


def _round_up(x, m):
    return ((x + m - 1) // m) * m


def _round_down(x, m):
    return (x // m) * m


# ----------------- VMEM budget / tiling selection ----------------------------

def _vmem_budget_bytes():
    """Returns (vmem_limit_bytes, per-grid-step block budget) for this TPU."""
    try:
        info = pltpu.get_tpu_info()
        cap = int(getattr(info, "vmem_capacity_bytes", 0)) or 64 * _MIB
    except Exception:
        cap = 64 * _MIB  # conservative fallback: v7x physical VMEM
    # Leave ~25% of physical VMEM for compiler scratch; cap per-step block
    # budget at 32 MiB (fits v7x; raises v5e/v6e scoped defaults via the
    # explicit vmem_limit_bytes below).
    vmem_limit = min((cap * 3) // 4, 96 * _MIB)
    block_budget = min((vmem_limit * 2) // 3, 32 * _MIB)
    return vmem_limit, block_budget


def _choose_tiling(B, D, N, tile_n, block_budget):
    # Bytes per (batch element, sequence column) per grid step:
    #   2 f32 inputs x 2 pipeline buffers (16*D) + phi/einsum temps (~8*D).
    per_col = 24 * D
    n128 = _round_up(N, 128)
    if tile_n is None:
        cap_cols = max(128, _round_down(block_budget // per_col, 128))
        tile_n = min(n128, cap_cols)
    else:
        tile_n = min(_round_up(tile_n, 128), n128)
    n_pad = _round_up(N, tile_n)
    n_tiles = n_pad // tile_n

    # Whole (padded) sequence fits one tile -> fold batches into the block.
    b_blk = 1
    if n_tiles == 1:
        b_cap = max(1, block_budget // (per_col * tile_n))
        b_blk = max(d for d in range(1, B + 1) if B % d == 0 and d <= b_cap)
    nb = B // b_blk

    # v7x megacore: with a single batch group, split the reduction axis into
    # two "parallel" halves producing partial KV accumulators.
    n_split = 2 if (nb < 2 and n_tiles >= 2 and n_tiles % 2 == 0) else 1
    n_inner = n_tiles // n_split
    return tile_n, n_pad, n_tiles, b_blk, nb, n_split, n_inner


# ----------------- pass 1: fused KV / K_sum accumulation ---------------------

def _make_kv_accum_kernel(n_valid, tile_n, n_inner, needs_mask):
    def kernel(scale_ref, k_ref, v_ref, kv_ref):
        t = pl.program_id(2)

        @pl.when(t == 0)
        def _():
            kv_ref[...] = jnp.zeros_like(kv_ref)

        scale = scale_ref[0]
        phi_k = _phi(k_ref[...] * scale)               # (b_blk, D, tile_n)
        if needs_mask:
            # Zero padded lanes BEFORE accumulating: phi(0)=1 would otherwise
            # corrupt both K_sum and (via V garbage) KV.
            s = pl.program_id(1)
            start = (s * n_inner + t) * tile_n
            lane = lax.broadcasted_iota(jnp.int32, (1, 1, tile_n), 2)
            phi_k = jnp.where(lane + start < n_valid, phi_k, 0.0)

        v = v_ref[...]                                 # (b_blk, D, tile_n)
        d = v.shape[1]
        # KV[b, d, e] += sum_n phi_K[b, d, n] * V[b, e, n]  (contract lane axis)
        kv_ref[:, :, :d] += jnp.einsum(
            "bdn,ben->bde", phi_k, v, preferred_element_type=jnp.float32)
        # K_sum fused as the last column of the same accumulator (no separate
        # lane-width-1 output / DMA).
        kv_ref[:, :, d:] += jnp.sum(phi_k, axis=2, keepdims=True)

    return kernel


# ----------------- pass 2: normalization + lane-dense output -----------------

def _attn_out_kernel(q_ref, kv_ref, o_ref):
    phi_q = _phi(q_ref[...])                           # (b_blk, D, tile_n)
    kv_aug = kv_ref[...]                               # (b_blk, D, D+1)
    # p[b, e, n] = sum_d kv_aug[b, d, e] * phi_q[b, d, n]
    # rows 0..D-1 -> numerator; row D -> denominator (K_sum . phi_Q), courtesy
    # of the fused accumulator — one matmul gives both.
    p = jnp.einsum("bde,bdn->ben", kv_aug, phi_q,
                   preferred_element_type=jnp.float32)
    d = kv_aug.shape[1]
    denom = p[:, d:, :] + 1e-8
    inv = pl.reciprocal(denom)                         # exact (approx=False)
    o_ref[...] = (p[:, :d, :] * inv).astype(o_ref.dtype)


# ----------------- wrapper ----------------------------------------------------

def linear_attention(q, k, v, scale_k, *, tile_n=None):
    """q, k, v: (B, Dim, Freq, Time).  Returns (B, Dim, Freq, Time)."""
    B, D, F, T = q.shape
    N = F * T
    vmem_limit, block_budget = _vmem_budget_bytes()
    tile_n, n_pad, n_tiles, b_blk, nb, n_split, n_inner = _choose_tiling(
        B, D, N, tile_n, block_budget)
    needs_mask = n_pad != N

    # Free reshapes: NCHW -> channel-major (B, D, N); N stays lane-dense.
    Qs = q.reshape(B, D, N)
    Ks = k.reshape(B, D, N)
    Vs = v.reshape(B, D, N)
    if needs_mask:
        pad = ((0, 0), (0, 0), (0, n_pad - N))
        Qs = jnp.pad(Qs, pad)
        Ks = jnp.pad(Ks, pad)
        Vs = jnp.pad(Vs, pad)
    scale_arr = jnp.full((1,), scale_k, dtype=jnp.float32)

    # ----- pass 1: accumulate fused (D, D+1) KV/K_sum per (batch grp, split)
    seq_spec1 = pl.BlockSpec((b_blk, D, tile_n),
                             lambda b, s, t: (b, 0, s * n_inner + t))
    kv_out_spec = pl.BlockSpec((b_blk, None, D, D + 1),
                               lambda b, s, t: (b, s, 0, 0))

    kv_partial = pl.pallas_call(
        _make_kv_accum_kernel(N, tile_n, n_inner, needs_mask),
        out_shape=jax.ShapeDtypeStruct((B, n_split, D, D + 1), jnp.float32),
        grid_spec=pltpu.PrefetchScalarGridSpec(
            num_scalar_prefetch=0,
            grid=(nb, n_split, n_inner),
            in_specs=[
                pl.BlockSpec(memory_space=pltpu.SMEM),   # scaleK scalar
                seq_spec1,                               # K
                seq_spec1,                               # V
            ],
            out_specs=kv_out_spec,
        ),
        compiler_params=pltpu.CompilerParams(
            dimension_semantics=("parallel", "parallel", "arbitrary"),
            vmem_limit_bytes=vmem_limit),
    )(scale_arr, Ks, Vs)

    # Combine the per-split partial accumulators (tiny (B, n_split, D, D+1)).
    kv_aug = jnp.sum(kv_partial, axis=1)

    # ----- pass 2: stream Q tiles, normalize, write lane-dense output tiles
    seq_spec2 = pl.BlockSpec((b_blk, D, tile_n), lambda b, t: (b, 0, t))
    out_dn = pl.pallas_call(
        _attn_out_kernel,
        out_shape=jax.ShapeDtypeStruct((B, D, n_pad), q.dtype),
        grid_spec=pltpu.PrefetchScalarGridSpec(
            num_scalar_prefetch=0,
            grid=(nb, n_tiles),
            in_specs=[
                seq_spec2,                                              # Q
                pl.BlockSpec((b_blk, D, D + 1), lambda b, t: (b, 0, 0)),  # KV
            ],
            out_specs=seq_spec2,
        ),
        compiler_params=pltpu.CompilerParams(
            dimension_semantics=("parallel", "parallel"),
            vmem_limit_bytes=vmem_limit),
    )(Qs, kv_aug)

    if needs_mask:
        out_dn = out_dn[:, :, :N]
    return out_dn.reshape(B, D, F, T)


# ----------------- pure-JAX reference (mirrors the torch code) ---------------

def _reference(q, k, v, scale_k):
    B, D, F, T = q.shape
    N = F * T
    Q = jnp.transpose(q.reshape(B, D, N), (0, 2, 1))
    K = jnp.transpose(k.reshape(B, D, N), (0, 2, 1))
    V = jnp.transpose(v.reshape(B, D, N), (0, 2, 1))
    phi_Q = jax.nn.elu(Q) + 1.0
    phi_K = jax.nn.elu(K * scale_k) + 1.0
    KV = jnp.einsum("bnd,bne->bde", phi_K, V)
    K_sum = jnp.sum(phi_K, axis=1)                        # (B, D)
    Z = 1.0 / (jnp.einsum("bnd,bd->bn", phi_Q, K_sum)[..., None] + 1e-8)
    V_new = jnp.einsum("bnd,bde->bne", phi_Q, KV) * Z
    return jnp.transpose(V_new, (0, 2, 1)).reshape(B, D, F, T)


def _check(q, k, v, scale_k, tile_n=None, name=""):
    out = jax.block_until_ready(
        linear_attention(q, k, v, scale_k, tile_n=tile_n))
    ref = _reference(q, k, v, scale_k)
    assert out.shape == q.shape, f"{name}: bad shape {out.shape}"
    err = float(jnp.max(jnp.abs(out - ref)))
    assert jnp.allclose(out, ref, atol=1e-3, rtol=1e-2), (
        f"{name}: mismatch vs reference, max abs err = {err}")


if __name__ == "__main__":
    key = jax.random.PRNGKey(0)
    scale_k = 1.0  # nn.Parameter(torch.tensor(1.0)) — deterministic init.

    def mk(shape, kk):
        k1, k2, k3 = jax.random.split(kk, 3)
        return (jax.random.normal(k1, shape, jnp.float32),
                jax.random.normal(k2, shape, jnp.float32),
                jax.random.normal(k3, shape, jnp.float32))

    keys = jax.random.split(key, 3)

    # 1) Small shape, auto tile: whole sequence in one tile, batches folded
    #    into the block -> a single grid step.
    q, k, v = mk((2, 4, 16, 16), keys[0])
    _check(q, k, v, scale_k, name="cfg1")

    # 2) Same shape, forced tile_n=128: exercises the multi-tile KV
    #    accumulation ("arbitrary" axis) path.
    _check(q, k, v, scale_k, tile_n=128, name="cfg2")

    # 3) B=1, forced small tiles: exercises the 2-way reduction split
    #    (per-core partial KV accumulators) used for v7x megacore.
    q3, k3, v3 = mk((1, 8, 16, 32), keys[1])
    _check(q3, k3, v3, scale_k, tile_n=128, name="cfg3")

    # 4) Ragged N (10*10 = 100): exercises pad + masked tail tile + crop.
    q4, k4, v4 = mk((2, 4, 10, 10), keys[2])
    _check(q4, k4, v4, scale_k, name="cfg4")

    print("KERNEL_OK")
</pallas_src>

<mosaic_0001>
module attributes {stable_mosaic.version = 11 : i64} {
  func.func @kernel(%arg0: i32, %arg1: i32, %arg2: i32, %arg3: memref<1xf32, #tpu.memory_space<smem>>, %arg4: memref<2x4x256xf32, #tpu.memory_space<vmem>>, %arg5: memref<2x4x256xf32, #tpu.memory_space<vmem>>, %arg6: memref<2x1x4x5xf32, #tpu.memory_space<vmem>>) attributes {dimension_semantics = [#tpu.dimension_semantics<parallel>, #tpu.dimension_semantics<parallel>, #tpu.dimension_semantics<arbitrary>], iteration_bounds = array<i64: 1, 1, 1>, scalar_prefetch = 0 : i64, scratch_operands = 0 : i64, tpu.core_type = #tpu.core_type<tc>, window_params = [{transform_indices = @transform_0, window_bounds = array<i64: 1>}, {transform_indices = @transform_1, window_bounds = array<i64: 2, 4, 256>}, {transform_indices = @transform_2, window_bounds = array<i64: 2, 4, 256>}, {transform_indices = @transform_3, window_bounds = array<i64: 2, 1, 4, 5>}]} {
    %c0_i32 = arith.constant 0 : i32
    %0 = arith.cmpi eq, %arg2, %c0_i32 : i32
    %1 = arith.extui %0 : i1 to i32
    %c0_i32_0 = arith.constant 0 : i32
    %2 = arith.cmpi ne, %1, %c0_i32_0 : i32
    scf.if %2 {
      %cst_25 = arith.constant 0.000000e+00 : f32
      %29 = vector.broadcast %cst_25 : f32 to vector<2x4x5xf32>
      %c0_26 = arith.constant 0 : index
      %c0_27 = arith.constant 0 : index
      %c0_28 = arith.constant 0 : index
      %c0_29 = arith.constant 0 : index
      %30 = vector.load %arg6[%c0_26, %c0_27, %c0_28, %c0_29] : memref<2x1x4x5xf32, #tpu.memory_space<vmem>>, vector<2x1x4x5xf32>
      %31 = vector.shape_cast %30 : vector<2x1x4x5xf32> to vector<2x4x5xf32>
      %32 = vector.shape_cast %29 : vector<2x4x5xf32> to vector<2x1x4x5xf32>
      tpu.vector_store %arg6[%c0_26, %c0_27, %c0_28, %c0_29], %32 {strides = array<i32>} : memref<2x1x4x5xf32, #tpu.memory_space<vmem>>, vector<2x1x4x5xf32>,
    } else {
    }
    %c0 = arith.constant 0 : index
    %3 = memref.load %arg3[%c0] : memref<1xf32, #tpu.memory_space<smem>>
    %c0_1 = arith.constant 0 : index
    %c0_2 = arith.constant 0 : index
    %c0_3 = arith.constant 0 : index
    %4 = vector.load %arg4[%c0_1, %c0_2, %c0_3] : memref<2x4x256xf32, #tpu.memory_space<vmem>>, vector<2x4x256xf32>
    %5 = vector.broadcast %3 : f32 to vector<2x4x256xf32>
    %6 = arith.mulf %4, %5 : vector<2x4x256xf32>
    %cst = arith.constant 0.000000e+00 : f32
    %7 = vector.broadcast %cst : f32 to vector<2x4x256xf32>
    %8 = arith.cmpf ogt, %6, %7 : vector<2x4x256xf32>
    %cst_4 = arith.constant 1.000000e+00 : f32
    %9 = vector.broadcast %cst_4 : f32 to vector<2x4x256xf32>
    %10 = arith.addf %6, %9 : vector<2x4x256xf32>
    %11 = math.exp %6 : vector<2x4x256xf32>
    %12 = arith.select %8, %10, %11 : vector<2x4x256xi1>, vector<2x4x256xf32>
    %c0_5 = arith.constant 0 : index
    %c0_6 = arith.constant 0 : index
    %c0_7 = arith.constant 0 : index
    %13 = vector.load %arg5[%c0_5, %c0_6, %c0_7] : memref<2x4x256xf32, #tpu.memory_space<vmem>>, vector<2x4x256xf32>
    %c0_8 = arith.constant 0 : index
    %c0_9 = arith.constant 0 : index
    %c0_10 = arith.constant 0 : index
    %c0_11 = arith.constant 0 : index
    %14 = vector.load %arg6[%c0_8, %c0_9, %c0_10, %c0_11] : memref<2x1x4x5xf32, #tpu.memory_space<vmem>>, vector<2x1x4x4xf32>
    %15 = vector.shape_cast %14 : vector<2x1x4x4xf32> to vector<2x4x4xf32>
    "tpu.trace_start"() <{level = 10 : i32, message = "bdn,ben->bde"}> : () -> ()
    %cst_12 = arith.constant dense<0.000000e+00> : vector<2x4x4xf32>
    %16 = tpu.matmul %12, %13, %cst_12 {dimension_numbers = #tpu.dot_dimension_numbers<[2], [2], [1], [1], [0, 0, 0, 1, 1, 1], [0], [0]>} : vector<2x4x256xf32>, vector<2x4x256xf32>, vector<2x4x4xf32> -> vector<2x4x4xf32>
    "tpu.trace_stop"() : () -> ()
    %17 = arith.addf %15, %16 : vector<2x4x4xf32>
    %c0_13 = arith.constant 0 : index
    %c0_14 = arith.constant 0 : index
    %c0_15 = arith.constant 0 : index
    %c0_16 = arith.constant 0 : index
    %18 = vector.load %arg6[%c0_13, %c0_14, %c0_15, %c0_16] : memref<2x1x4x5xf32, #tpu.memory_space<vmem>>, vector<2x1x4x4xf32>
    %19 = vector.shape_cast %18 : vector<2x1x4x4xf32> to vector<2x4x4xf32>
    %20 = vector.shape_cast %17 : vector<2x4x4xf32> to vector<2x1x4x4xf32>
    tpu.vector_store %arg6[%c0_13, %c0_14, %c0_15, %c0_16], %20 {strides = array<i32>} : memref<2x1x4x5xf32, #tpu.memory_space<vmem>>, vector<2x1x4x4xf32>,
    %c0_17 = arith.constant 0 : index
    %c0_18 = arith.constant 0 : index
    %c0_19 = arith.constant 0 : index
    %c4 = arith.constant 4 : index
    %21 = vector.load %arg6[%c0_17, %c0_18, %c0_19, %c4] : memref<2x1x4x5xf32, #tpu.memory_space<vmem>>, vector<2x1x4x1xf32>
    %22 = vector.shape_cast %21 : vector<2x1x4x1xf32> to vector<2x4x1xf32>
    %cst_20 = arith.constant dense<0.000000e+00> : vector<2x4xf32>
    %23 = vector.multi_reduction <add>, %12, %cst_20 [2] : vector<2x4x256xf32> to vector<2x4xf32>
    %24 = vector.shape_cast %23 : vector<2x4xf32> to vector<2x4x1xf32>
    %25 = arith.addf %22, %24 : vector<2x4x1xf32>
    %c0_21 = arith.constant 0 : index
    %c0_22 = arith.constant 0 : index
    %c0_23 = arith.constant 0 : index
    %c4_24 = arith.constant 4 : index
    %26 = vector.load %arg6[%c0_21, %c0_22, %c0_23, %c4_24] : memref<2x1x4x5xf32, #tpu.memory_space<vmem>>, vector<2x1x4x1xf32>
    %27 = vector.shape_cast %26 : vector<2x1x4x1xf32> to vector<2x4x1xf32>
    %28 = vector.shape_cast %25 : vector<2x4x1xf32> to vector<2x1x4x1xf32>
    tpu.vector_store %arg6[%c0_21, %c0_22, %c0_23, %c4_24], %28 {strides = array<i32>} : memref<2x1x4x5xf32, #tpu.memory_space<vmem>>, vector<2x1x4x1xf32>,
    return
  }
  func.func @transform_0(%arg0: i32, %arg1: i32, %arg2: i32) -> i32 {
    %c0_i32 = arith.constant 0 : i32
    %c0_i32_0 = arith.constant 0 : i32
    return %c0_i32 : i32
  }
  func.func @transform_1(%arg0: i32, %arg1: i32, %arg2: i32) -> (i32, i32, i32) {
    %c1_i32 = arith.constant 1 : i32
    %0 = arith.muli %arg1, %c1_i32 : i32
    %1 = arith.addi %0, %arg2 : i32
    %c0_i32 = arith.constant 0 : i32
    %c0_i32_0 = arith.constant 0 : i32
    return %arg0, %c0_i32, %1 : i32, i32, i32
  }
  func.func @transform_2(%arg0: i32, %arg1: i32, %arg2: i32) -> (i32, i32, i32) {
    %c1_i32 = arith.constant 1 : i32
    %0 = arith.muli %arg1, %c1_i32 : i32
    %1 = arith.addi %0, %arg2 : i32
    %c0_i32 = arith.constant 0 : i32
    %c0_i32_0 = arith.constant 0 : i32
    return %arg0, %c0_i32, %1 : i32, i32, i32
  }
  func.func @transform_3(%arg0: i32, %arg1: i32, %arg2: i32) -> (i32, i32, i32, i32) {
    %c0_i32 = arith.constant 0 : i32
    %c0_i32_0 = arith.constant 0 : i32
    %c0_i32_1 = arith.constant 0 : i32
    return %arg0, %arg1, %c0_i32, %c0_i32_0 : i32, i32, i32, i32
  }
}

</mosaic_0001>

<llo_original>
// kernel: tpu_custom_call.1
$region0: #{tpu_custom_call.1}
  #allocation0 [shape = 'u32[]', space=smem, size = 0x4, offset = 0x4, fixed_abs, tag = 'smem constant byte address 0x4 - core index']
  #allocation1 [shape = 'u32[144,128]{1,0:T(1,128)}', space=vmem, size = 0x12000, scoped, tag = 'internal scratch']
  #allocation2 [shape = 'f32[1]{0:T(128)S(6)}', space=smem, size = 0x200, scoped, tag = 'scoped memory for tpu_custom_call.1']
  %s0 = inlined_call_operand.<no memory space> [shape: f32[1], index: 0, kind: input, shape index: {}]
  %s1 = inlined_call_operand.hbm [shape: f32[2,4,256], index: 1, kind: input, shape index: {}]
  %s2 = inlined_call_operand.hbm [shape: f32[2,4,256], index: 2, kind: input, shape index: {}]
  %s3 = inlined_call_operand.hbm [shape: f32[2,1,4,5], index: 3, kind: output, shape index: {}]
  %s4 = sld [smem:[#allocation0]]
  $region34: #{tpu_custom_call.1} parent=0
    _
  %s6 = ssub.s32 1, %s4
  %s7 = scalar_select 0, %s6, %s4
  %8 = sst [smem:[#allocation2]] %s0
  $region1: #{tpu_custom_call.1} parent=0
    #allocation3 [shape = 'u8[8192]{0}', space=vmem, size = 0x2000, scoped, tag = 'input window, operand 1, single buffered']
    #allocation4 [shape = 's32[1]{0}', space=sflag, size = 0x4, scoped, tag = 'scoped memory for tpu_custom_call.1']
    #allocation5 [shape = 's32[1]{0}', space=sflag, size = 0x4, scoped, tag = 'scoped memory for tpu_custom_call.1']
    #allocation6 [shape = 'u8[8192]{0}', space=vmem, size = 0x2000, scoped, tag = 'input window, operand 2, single buffered']
    #allocation7 [shape = 's32[1]{0}', space=sflag, size = 0x4, scoped, tag = 'scoped memory for tpu_custom_call.1']
    #allocation8 [shape = 'u8[4096]{0}', space=vmem, size = 0x1000, scoped, tag = 'output window, operand 0, single buffered']
    %9 = vsyncpa [#allocation4], 0
    %10 = vsyncpa [#allocation7], 0
    %11 = vsyncpa [#allocation5], 0
    // Predicated region
    $region2: #{tpu_custom_call.1} parent=1 // pred_check
      _
    $region3: #{tpu_custom_call.1} parent=1 // pred_check_branch
      %13 = sbr.rel (0) target = $region5
    $region4: #{tpu_custom_call.1} parent=1 // pred_region
      _
    $region5: #{tpu_custom_call.1} parent=1 // pred_fallthru
      _
    // Predicated region
    $region6: #{tpu_custom_call.1} parent=1 // pred_check
      _
    $region7: #{tpu_custom_call.1} parent=1 // pred_check_branch
      %15 = sbr.rel (0) target = $region9
    $region8: #{tpu_custom_call.1} parent=1 // pred_region
      %s16 = sadd.s32 0, 0
      %s17 = smul.u32 2, %s16
      %s19 = ssub.s32 256, 256
      %20 = vsyncadd [#allocation4], %s19
      %s21 = smul.addr %s17, 64
      %s22 = scalar_lea.hbm %s1, %s21
      %s23 = sshll.u32 [#allocation3], 4
      %s24 = int_to_ptr.vmem [resolvable:$true] %s23
      %29 = dma.hbm_to_vmem [thread:$0]  %s22, 256, %s24, [#allocation4], 128, 128, 8
    $region9: #{tpu_custom_call.1} parent=1 // pred_fallthru
      _
    // Predicated region
    $region10: #{tpu_custom_call.1} parent=1 // pred_check
      _
    $region11: #{tpu_custom_call.1} parent=1 // pred_check_branch
      %31 = sbr.rel (0) target = $region13
    $region12: #{tpu_custom_call.1} parent=1 // pred_region
      %s32 = sadd.s32 0, 0
      %s33 = smul.u32 2, %s32
      %s35 = ssub.s32 256, 256
      %36 = vsyncadd [#allocation7], %s35
      %s37 = smul.addr %s33, 64
      %s38 = scalar_lea.hbm %s2, %s37
      %s39 = sshll.u32 [#allocation6], 4
      %s40 = int_to_ptr.vmem [resolvable:$true] %s39
      %45 = dma.hbm_to_vmem [thread:$0]  %s38, 256, %s40, [#allocation7], 128, 128, 8
    $region13: #{tpu_custom_call.1} parent=1 // pred_fallthru
      _
    // Predicated region
    $region14: #{tpu_custom_call.1} parent=1 // pred_check
      _
    $region15: #{tpu_custom_call.1} parent=1 // pred_check_branch
      %47 = sbr.rel (0) target = $region17
    $region16: #{tpu_custom_call.1} parent=1 // pred_region
      %48 = dma.done [#allocation4], 256
    $region17: #{tpu_custom_call.1} parent=1 // pred_fallthru
      _
    // Predicated region
    $region18: #{tpu_custom_call.1} parent=1 // pred_check
      _
    $region19: #{tpu_custom_call.1} parent=1 // pred_check_branch
      %50 = sbr.rel (0) target = $region21
    $region20: #{tpu_custom_call.1} parent=1 // pred_region
      %51 = dma.done [#allocation7], 256
    $region21: #{tpu_custom_call.1} parent=1 // pred_fallthru
      _
    %s52 = sadd.s32 0, 0
    %s53 = smul.u32 2, %s52
    %s54 = sadd.s32 0, 0
    %s55 = smul.u32 2, %s54
    %p56 = scmp.eq.s32.totalorder 0, 0
    // Predicated region
    $region22: #{tpu_custom_call.1} parent=1 // pred_check
      %p57 = pneg %p56
    $region23: #{tpu_custom_call.1} parent=1 // pred_check_branch
      %59 = sbr.rel (%p57) target = $region25
    $region24: #{tpu_custom_call.1} parent=1 // pred_region
      %vm60 = vcmask 35840
      %61 = vst.msk [vmem:[#allocation8] sm:$0xf] %vm60, 0.0
      %62 = vst.msk [vmem:[#allocation8 + $0x4] sm:$0xf] %vm60, 0.0
    $region25: #{tpu_custom_call.1} parent=1 // pred_fallthru
      _
    %s63 = sld [smem:[#allocation2]]
    %v64 = vld [vmem:[#allocation3] sm:$0xff]
    %v65 = vld [vmem:[#allocation3 + $0x8] sm:$0xff]
    %v66 = vstv %s63
    %v67 = vmul.f32 %v64, %v66
    %v68 = vmul.f32 %v65, %v66
    %vm69 = vcmp.gt.f32.partialorder %v67, 0.0
    %vm70 = vcmp.gt.f32.partialorder %v68, 0.0
    %v71 = vadd.f32 %v67, 1.0
    %v72 = vadd.f32 %v68, 1.0
    %v73 = vmul.f32 %v67, 1.442695
    %v74 = vpow.pop %v73
    %v75 = vmul.f32 %v68, 1.442695
    %v76 = vpow.pop %v75
    %v77 = vsel %vm69, %v71, %v74
    %v78 = vsel %vm70, %v72, %v76
    %v79 = vld [vmem:[#allocation6] sm:$0xff]
    %v80 = vld [vmem:[#allocation6 + $0x8] sm:$0xff]
    %v81 = vld [vmem:[#allocation8] sm:$0xf]
    %v82 = vld [vmem:[#allocation8 + $0x4] sm:$0xf]
    %v84 = vcombine.high %v77, %v77
    %v87 = vcombine.high %v79, %v79
    %89 = vmatprep.subr.mxu0 0.0
    %90 = vmatpush1.xpose.msra.mxu0 0.0
    %91 = vmatprep.subr.mxu0 0.0
    %92 = vmatpush1.xpose.msra.mxu0 0.0
    %93 = vmatprep.subr.mxu0 0.0
    %94 = vmatpush1.xpose.msra.mxu0 0.0
    %95 = vmatprep.subr.mxu0 0.0
    %96 = vmatpush1.xpose.msra.mxu0 0.0
    %97 = vmatprep.subr.mxu0 0.0
    %98 = vmatpush1.xpose.msra.mxu0 0.0
    %99 = vmatprep.subr.mxu0 0.0
    %100 = vmatpush1.xpose.msra.mxu0 0.0
    %101 = vmatprep.subr.mxu0 0.0
    %102 = vmatpush1.xpose.msra.mxu0 0.0
    %103 = vmatprep.subr.mxu0 0.0
    %104 = vmatpush1.xpose.msra.mxu0 0.0
    %105 = vmatprep.subr.mxu0 0.0
    %106 = vmatpush1.xpose.msra.mxu0 0.0
    %107 = vmatprep.subr.mxu0 0.0
    %108 = vmatpush1.xpose.msra.mxu0 0.0
    %109 = vmatprep.subr.mxu0 0.0
    %110 = vmatpush1.xpose.msra.mxu0 0.0
    %111 = vmatprep.subr.mxu0 0.0
    %112 = vmatpush1.xpose.msra.mxu0 0.0
    %113 = vmatprep.subr.mxu0 0.0
    %114 = vmatpush1.xpose.msra.mxu0 0.0
    %115 = vmatprep.subr.mxu0 0.0
    %116 = vmatpush1.xpose.msra.mxu0 0.0
    %117 = vmatprep.subr.mxu0 0.0
    %118 = vmatpush1.xpose.msra.mxu0 0.0
    %119 = vmatprep.subr.mxu0 %v87
    %120 = vmatpush1.xpose.msra.mxu0 %v79
    %121 = vmatprep.subr.mxu0 0.0
    %122 = vmatpush2.xpose.msra.mxu0 0.0
    %123 = vmatprep.subr.mxu0 0.0
    %124 = vmatpush2.xpose.msra.mxu0 0.0
    %125 = vmatprep.subr.mxu0 0.0
    %126 = vmatpush2.xpose.msra.mxu0 0.0
    %127 = vmatprep.subr.mxu0 0.0
    %128 = vmatpush2.xpose.msra.mxu0 0.0
    %129 = vmatprep.subr.mxu0 0.0
    %130 = vmatpush2.xpose.msra.mxu0 0.0
    %131 = vmatprep.subr.mxu0 0.0
    %132 = vmatpush2.xpose.msra.mxu0 0.0
    %133 = vmatprep.subr.mxu0 0.0
    %134 = vmatpush2.xpose.msra.mxu0 0.0
    %135 = vmatprep.subr.mxu0 0.0
    %136 = vmatpush2.xpose.msra.mxu0 0.0
    %137 = vmatprep.subr.mxu0 0.0
    %138 = vmatpush2.xpose.msra.mxu0 0.0
    %139 = vmatprep.subr.mxu0 0.0
    %140 = vmatpush2.xpose.msra.mxu0 0.0
    %141 = vmatprep.subr.mxu0 0.0
    %142 = vmatpush2.xpose.msra.mxu0 0.0
    %143 = vmatprep.subr.mxu0 0.0
    %144 = vmatpush2.xpose.msra.mxu0 0.0
    %145 = vmatprep.subr.mxu0 0.0
    %146 = vmatpush2.xpose.msra.mxu0 0.0
    %147 = vmatprep.subr.mxu0 0.0
    %148 = vmatpush2.xpose.msra.mxu0 0.0
    %149 = vmatprep.subr.mxu0 0.0
    %150 = vmatpush2.xpose.msra.mxu0 0.0
    %151 = vmatprep.subr.mxu0 0.0
    %152 = vmatpush2.xpose.msra.mxu0 0.0
    %153 = vmatprep.mubr.f32.mxu0 %v84
    %154 = vmatmul.mubr.f32.gmra.mxu0 %v77
    %v155 = vpop.f32.mrf.mxu0
    %v156 = vadd.f32 0.0, %v155
    %v157 = vpop.f32.mrf.mxu0
    %158 = vdwg.mxu0
    %v160 = vcombine.high %v78, %v78
    %v163 = vcombine.high %v80, %v80
    %165 = vmatprep.subr.mxu0 0.0
    %166 = vmatpush1.xpose.msra.mxu0 0.0
    %167 = vmatprep.subr.mxu0 0.0
    %168 = vmatpush1.xpose.msra.mxu0 0.0
    %169 = vmatprep.subr.mxu0 0.0
    %170 = vmatpush1.xpose.msra.mxu0 0.0
    %171 = vmatprep.subr.mxu0 0.0
    %172 = vmatpush1.xpose.msra.mxu0 0.0
    %173 = vmatprep.subr.mxu0 0.0
    %174 = vmatpush1.xpose.msra.mxu0 0.0
    %175 = vmatprep.subr.mxu0 0.0
    %176 = vmatpush1.xpose.msra.mxu0 0.0
    %177 = vmatprep.subr.mxu0 0.0
    %178 = vmatpush1.xpose.msra.mxu0 0.0
    %179 = vmatprep.subr.mxu0 0.0
    %180 = vmatpush1.xpose.msra.mxu0 0.0
    %181 = vmatprep.subr.mxu0 0.0
    %182 = vmatpush1.xpose.msra.mxu0 0.0
    %183 = vmatprep.subr.mxu0 0.0
    %184 = vmatpush1.xpose.msra.mxu0 0.0
    %185 = vmatprep.subr.mxu0 0.0
    %186 = vmatpush1.xpose.msra.mxu0 0.0
    %187 = vmatprep.subr.mxu0 0.0
    %188 = vmatpush1.xpose.msra.mxu0 0.0
    %189 = vmatprep.subr.mxu0 0.0
    %190 = vmatpush1.xpose.msra.mxu0 0.0
    %191 = vmatprep.subr.mxu0 0.0
    %192 = vmatpush1.xpose.msra.mxu0 0.0
    %193 = vmatprep.subr.mxu0 0.0
    %194 = vmatpush1.xpose.msra.mxu0 0.0
    %195 = vmatprep.subr.mxu0 %v163
    %196 = vmatpush1.xpose.msra.mxu0 %v80
    %197 = vmatprep.subr.mxu0 0.0
    %198 = vmatpush2.xpose.msra.mxu0 0.0
    %199 = vmatprep.subr.mxu0 0.0
    %200 = vmatpush2.xpose.msra.mxu0 0.0
    %201 = vmatprep.subr.mxu0 0.0
    %202 = vmatpush2.xpose.msra.mxu0 0.0
    %203 = vmatprep.subr.mxu0 0.0
    %204 = vmatpush2.xpose.msra.mxu0 0.0
    %205 = vmatprep.subr.mxu0 0.0
    %206 = vmatpush2.xpose.msra.mxu0 0.0
    %207 = vmatprep.subr.mxu0 0.0
    %208 = vmatpush2.xpose.msra.mxu0 0.0
    %209 = vmatprep.subr.mxu0 0.0
    %210 = vmatpush2.xpose.msra.mxu0 0.0
    %211 = vmatprep.subr.mxu0 0.0
    %212 = vmatpush2.xpose.msra.mxu0 0.0
    %213 = vmatprep.subr.mxu0 0.0
    %214 = vmatpush2.xpose.msra.mxu0 0.0
    %215 = vmatprep.subr.mxu0 0.0
    %216 = vmatpush2.xpose.msra.mxu0 0.0
    %217 = vmatprep.subr.mxu0 0.0
    %218 = vmatpush2.xpose.msra.mxu0 0.0
    %219 = vmatprep.subr.mxu0 0.0
    %220 = vmatpush2.xpose.msra.mxu0 0.0
    %221 = vmatprep.subr.mxu0 0.0
    %222 = vmatpush2.xpose.msra.mxu0 0.0
    %223 = vmatprep.subr.mxu0 0.0
    %224 = vmatpush2.xpose.msra.mxu0 0.0
    %225 = vmatprep.subr.mxu0 0.0
    %226 = vmatpush2.xpose.msra.mxu0 0.0
    %227 = vmatprep.subr.mxu0 0.0
    %228 = vmatpush2.xpose.msra.mxu0 0.0
    %229 = vmatprep.mubr.f32.mxu0 %v160
    %230 = vmatmul.mubr.f32.gmra.mxu0 %v78
    %v231 = vpop.f32.mrf.mxu0
    %v232 = vadd.f32 0.0, %v231
    %v233 = vpop.f32.mrf.mxu0
    %234 = vdwg.mxu0
    %v235 = vadd.f32 %v81, %v156
    %v236 = vadd.f32 %v82, %v232
    %vm237 = vcmask 27648
    %238 = vst.msk [vmem:[#allocation8] sm:$0xf] %vm237, %v235
    %239 = vst.msk [vmem:[#allocation8 + $0x4] sm:$0xf] %vm237, %v236
    %v240 = vld [vmem:[#allocation8] sm:$0xf]
    %v241 = vld [vmem:[#allocation8 + $0x4] sm:$0xf]
    %vm242 = vcmask 1043456
    %v243 = vsel %vm242, %v77, 0.0
    %v244 = vsel %vm242, %v84, 0.0
    %v245 = vadd.f32 %v243, %v244
    %246 = vadd.xlane.f32.xlu0 %v245
    %v247 = vpop.xlane.xlu0 %246
    %v248 = vsel %vm242, %v78, 0.0
    %v249 = vsel %vm242, %v160, 0.0
    %v250 = vadd.f32 %v248, %v249
    %251 = vadd.xlane.f32.xlu0 %v250
    %v252 = vpop.xlane.xlu0 %251
    %v253 = vadd.f32 %v240, %v247
    %v254 = vadd.f32 %v241, %v252
    %vm255 = vcmask 35872
    %256 = vst.msk [vmem:[#allocation8] sm:$0xf] %vm255, %v253
    %257 = vst.msk [vmem:[#allocation8 + $0x4] sm:$0xf] %vm255, %v254
    // Predicated region
    $region26: #{tpu_custom_call.1} parent=1 // pred_check
      _
    $region27: #{tpu_custom_call.1} parent=1 // pred_check_branch
      %259 = sbr.rel (0) target = $region29
    $region28: #{tpu_custom_call.1} parent=1 // pred_region
      %s261 = ssub.s32 128, 128
      %262 = vsyncadd [#allocation5], %s261
      %s263 = sshll.u32 [#allocation8], 4
      %s264 = int_to_ptr.vmem [resolvable:$true] %s263
      %269 = dma.vmem_to_hbm [thread:$0]  %s264, 128, %s3, [#allocation5], 64, 64, 4
    $region29: #{tpu_custom_call.1} parent=1 // pred_fallthru
      _
    // Predicated region
    $region30: #{tpu_custom_call.1} parent=1 // pred_check
      _
    $region31: #{tpu_custom_call.1} parent=1 // pred_check_branch
      %271 = sbr.rel (0) target = $region33
    $region32: #{tpu_custom_call.1} parent=1 // pred_region
      %272 = dma.done [#allocation5], 128
    $region33: #{tpu_custom_call.1} parent=1 // pred_fallthru
      _
    %273 = vsyncpa [#allocation4], 1
    %274 = vsyncpa [#allocation7], 1
    %275 = vsyncpa [#allocation5], 1

</llo_original>
